<compile_context>
chip_gen: v7x
topology: tpu7x:2x2x1
jax: 0.10.0
libtpu: 0.0.40
codegen_flags: <defaults>
</compile_context>

<pallas_src>
import jax
import jax.numpy as jnp
from jax.experimental import pallas as pl
from jax.experimental.pallas import tpu as pltpu

EPS = 1e-5  # PyTorch nn.LayerNorm default eps


# ---------------------------------------------------------------------------
# In-kernel helpers
# ---------------------------------------------------------------------------
def _ln_rows(x, gamma, beta):
    """LayerNorm over the last axis; statistics in f32 (PyTorch semantics)."""
    xf = x if x.dtype == jnp.float32 else x.astype(jnp.float32)
    mu = jnp.mean(xf, axis=-1, keepdims=True)
    var = jnp.mean((xf - mu) ** 2, axis=-1, keepdims=True)   # biased, like PyTorch
    return (xf - mu) * jax.lax.rsqrt(var + EPS) * gamma + beta


# ---------------------------------------------------------------------------
# Fused PreNorm kernel (with context): LN(x), LN(ctx), pool, project, bias
# ---------------------------------------------------------------------------
def _prenorm_ctx_kernel(x_ref, ctx_ref, gx_ref, bx_ref, gc_ref, bc_ref,
                        wx_ref, wc_ref, bias_ref, o_ref, pooled_ref):
    # Context path: LN + pool + project, computed ONCE per batch (first row
    # tile) and stashed in VMEM scratch for all later row tiles of this batch.
    @pl.when(pl.program_id(1) == 0)
    def _():
        cn = _ln_rows(ctx_ref[...], gc_ref[...], bc_ref[...])          # (M, C) f32
        pooled_c = jnp.mean(cn, axis=0, keepdims=True)                 # (1, C)
        # mean(LN(ctx)) @ Wc == mean(LN(ctx) @ Wc)  -> M-fold less MXU work.
        pooled_ref[...] = jnp.dot(pooled_c.astype(wc_ref.dtype), wc_ref[...],
                                  preferred_element_type=jnp.float32)  # (1, D)

    # x path: LN + projection + bias, per row tile.
    xn = _ln_rows(x_ref[...], gx_ref[...], bx_ref[...])                # (tn, D)
    h = jnp.dot(xn.astype(wx_ref.dtype), wx_ref[...],
                preferred_element_type=jnp.float32)                    # (tn, D)
    o_ref[...] = (h + pooled_ref[...] + bias_ref[...]).astype(o_ref.dtype)


# Fused PreNorm kernel (no context): LN(x), project, bias
def _prenorm_noctx_kernel(x_ref, gx_ref, bx_ref, wx_ref, bias_ref, o_ref):
    xn = _ln_rows(x_ref[...], gx_ref[...], bx_ref[...])
    h = jnp.dot(xn.astype(wx_ref.dtype), wx_ref[...],
                preferred_element_type=jnp.float32)
    o_ref[...] = (h + bias_ref[...]).astype(o_ref.dtype)


# ---------------------------------------------------------------------------
# Wrapper
# ---------------------------------------------------------------------------
def _pick_row_tile(n):
    # Row tiles a multiple of 8 (sublane), big enough for pipelining, small
    # enough that (in + out) double-buffers fit comfortably in 64 MiB VMEM.
    return n if n <= 256 else 256


def prenorm_forward(params, x, context=None, matmul_dtype=None):
    """PreNorm forward:  fn(LN(x), context=LN(context)).

    `matmul_dtype=jnp.bfloat16` feeds the MXU bf16 operands (f32 accumulate);
    LayerNorm statistics always stay in f32.
    """
    B, N, D = x.shape
    tn = _pick_row_tile(N)
    grid_n = pl.cdiv(N, tn)

    gx = params["g_x"].reshape(1, D).astype(jnp.float32)
    bx = params["b_x"].reshape(1, D).astype(jnp.float32)
    bias = params["bias"].reshape(1, D).astype(jnp.float32)
    wx = params["wx"]
    if matmul_dtype is not None:
        wx = wx.astype(matmul_dtype)

    x_spec = pl.BlockSpec((None, tn, D), lambda b, j: (b, j, 0))
    o_spec = pl.BlockSpec((None, tn, D), lambda b, j: (b, j, 0))
    vec_d = pl.BlockSpec((1, D), lambda b, j: (0, 0))
    wx_spec = pl.BlockSpec((D, D), lambda b, j: (0, 0))

    if context is not None and params.get("g_ctx") is not None:
        _, M, C = context.shape
        gc = params["g_ctx"].reshape(1, C).astype(jnp.float32)
        bc = params["b_ctx"].reshape(1, C).astype(jnp.float32)
        wc = params["wc"]
        if matmul_dtype is not None:
            wc = wc.astype(matmul_dtype)
        vec_c = pl.BlockSpec((1, C), lambda b, j: (0, 0))
        return pl.pallas_call(
            _prenorm_ctx_kernel,
            out_shape=jax.ShapeDtypeStruct((B, N, D), x.dtype),
            grid=(B, grid_n),
            in_specs=[
                x_spec,
                pl.BlockSpec((None, M, C), lambda b, j: (b, 0, 0)),
                vec_d, vec_d, vec_c, vec_c,
                wx_spec,
                pl.BlockSpec((C, D), lambda b, j: (0, 0)),
                vec_d,
            ],
            out_specs=o_spec,
            scratch_shapes=[pltpu.VMEM((1, D), jnp.float32)],
            compiler_params=pltpu.CompilerParams(
                dimension_semantics=("parallel", "arbitrary")),
        )(x, context, gx, bx, gc, bc, wx, wc, bias)

    # context-less PreNorm (norm_context is None): fn(LN(x)) = LN(x)@Wx + bias
    return pl.pallas_call(
        _prenorm_noctx_kernel,
        out_shape=jax.ShapeDtypeStruct((B, N, D), x.dtype),
        grid=(B, grid_n),
        in_specs=[x_spec, vec_d, vec_d, wx_spec, vec_d],
        out_specs=o_spec,
        compiler_params=pltpu.CompilerParams(
            dimension_semantics=("parallel", "parallel")),
    )(x, gx, bx, wx, bias)


# ---------------------------------------------------------------------------
# Pure-JAX reference (for correctness checks)
# ---------------------------------------------------------------------------
def _ln_ref(x, g, b):
    mu = jnp.mean(x, axis=-1, keepdims=True)
    var = jnp.mean((x - mu) ** 2, axis=-1, keepdims=True)
    return (x - mu) * jax.lax.rsqrt(var + EPS) * g + b


def prenorm_ref(params, x, context):
    x_n = _ln_ref(x, params["g_x"], params["b_x"])
    c_n = _ln_ref(context, params["g_ctx"], params["b_ctx"])
    h = x_n @ params["wx"]
    pooled = jnp.mean(c_n @ params["wc"], axis=1, keepdims=True)
    return h + pooled + params["bias"]


def prenorm_ref_noctx(params, x):
    x_n = _ln_ref(x, params["g_x"], params["b_x"])
    return x_n @ params["wx"] + params["bias"]


if __name__ == "__main__":
    B, N, D = 2, 8, 32      # x: [batch, seq, dim]
    M, C = 16, 64           # context: [batch, ctx_seq, context_dim]

    key = jax.random.PRNGKey(0)
    kx, kc, kg1, kb1, kg2, kb2, kwx, kwc, kbias = jax.random.split(key, 9)

    x = jax.random.normal(kx, (B, N, D), dtype=jnp.float32)
    context = jax.random.normal(kc, (B, M, C), dtype=jnp.float32)

    params = {
        # nn.LayerNorm(dim) / nn.LayerNorm(context_dim) parameters
        "g_x": 1.0 + 0.1 * jax.random.normal(kg1, (D,), dtype=jnp.float32),
        "b_x": 0.1 * jax.random.normal(kb1, (D,), dtype=jnp.float32),
        "g_ctx": 1.0 + 0.1 * jax.random.normal(kg2, (C,), dtype=jnp.float32),
        "b_ctx": 0.1 * jax.random.normal(kb2, (C,), dtype=jnp.float32),
        # synthetic `fn` parameters
        "wx": jax.random.normal(kwx, (D, D), dtype=jnp.float32) / jnp.sqrt(D),
        "wc": jax.random.normal(kwc, (C, D), dtype=jnp.float32) / jnp.sqrt(C),
        "bias": 0.1 * jax.random.normal(kbias, (D,), dtype=jnp.float32),
    }

    # 1) fused kernel, f32 matmuls — strict check vs reference
    out = prenorm_forward(params, x, context=context)
    out = jax.block_until_ready(out)
    ref = prenorm_ref(params, x, context)
    assert out.shape == (B, N, D)
    assert jnp.allclose(out, ref, rtol=1e-4, atol=1e-4), "f32 mismatch vs reference"

    # 2) fused kernel, bf16 MXU operands (f32 accumulate) — relaxed check
    out_bf16 = prenorm_forward(params, x, context=context,
                               matmul_dtype=jnp.bfloat16)
    out_bf16 = jax.block_until_ready(out_bf16)
    assert jnp.allclose(out_bf16, ref, rtol=3e-2, atol=3e-2), "bf16 mismatch vs reference"

    # 3) context-less PreNorm path (norm_context is None)
    out_nc = prenorm_forward(params, x, context=None)
    out_nc = jax.block_until_ready(out_nc)
    ref_nc = prenorm_ref_noctx(params, x)
    assert jnp.allclose(out_nc, ref_nc, rtol=1e-4, atol=1e-4), "no-ctx mismatch vs reference"

    print("KERNEL_OK")
</pallas_src>

<mosaic_0001>
module attributes {stable_mosaic.version = 11 : i64} {
  func.func @_prenorm_ctx_kernel(%arg0: i32, %arg1: i32, %arg2: memref<1x8x32xf32, #tpu.memory_space<vmem>>, %arg3: memref<1x16x64xf32, #tpu.memory_space<vmem>>, %arg4: memref<1x32xf32, #tpu.memory_space<vmem>>, %arg5: memref<1x32xf32, #tpu.memory_space<vmem>>, %arg6: memref<1x64xf32, #tpu.memory_space<vmem>>, %arg7: memref<1x64xf32, #tpu.memory_space<vmem>>, %arg8: memref<32x32xf32, #tpu.memory_space<vmem>>, %arg9: memref<64x32xf32, #tpu.memory_space<vmem>>, %arg10: memref<1x32xf32, #tpu.memory_space<vmem>>, %arg11: memref<1x8x32xf32, #tpu.memory_space<vmem>>, %arg12: memref<1x32xf32, #tpu.memory_space<vmem>>) attributes {dimension_semantics = [#tpu.dimension_semantics<parallel>, #tpu.dimension_semantics<arbitrary>], iteration_bounds = array<i64: 2, 1>, scalar_prefetch = 0 : i64, scratch_operands = 1 : i64, tpu.core_type = #tpu.core_type<tc>, window_params = [{transform_indices = @transform_0, window_bounds = array<i64: 1, 8, 32>}, {transform_indices = @transform_1, window_bounds = array<i64: 1, 16, 64>}, {pipeline_mode = #tpu.pipeline_mode<synchronous>, transform_indices = @transform_2, window_bounds = array<i64: 1, 32>}, {pipeline_mode = #tpu.pipeline_mode<synchronous>, transform_indices = @transform_3, window_bounds = array<i64: 1, 32>}, {pipeline_mode = #tpu.pipeline_mode<synchronous>, transform_indices = @transform_4, window_bounds = array<i64: 1, 64>}, {pipeline_mode = #tpu.pipeline_mode<synchronous>, transform_indices = @transform_5, window_bounds = array<i64: 1, 64>}, {pipeline_mode = #tpu.pipeline_mode<synchronous>, transform_indices = @transform_6, window_bounds = array<i64: 32, 32>}, {pipeline_mode = #tpu.pipeline_mode<synchronous>, transform_indices = @transform_7, window_bounds = array<i64: 64, 32>}, {pipeline_mode = #tpu.pipeline_mode<synchronous>, transform_indices = @transform_8, window_bounds = array<i64: 1, 32>}, {transform_indices = @transform_9, window_bounds = array<i64: 1, 8, 32>}]} {
    %c0_i32 = arith.constant 0 : i32
    %0 = arith.cmpi eq, %arg1, %c0_i32 : i32
    %1 = arith.extui %0 : i1 to i32
    %c0_i32_0 = arith.constant 0 : i32
    %2 = arith.cmpi ne, %1, %c0_i32_0 : i32
    scf.if %2 {
      %c0_21 = arith.constant 0 : index
      %c0_22 = arith.constant 0 : index
      %c0_23 = arith.constant 0 : index
      %40 = vector.load %arg3[%c0_21, %c0_22, %c0_23] : memref<1x16x64xf32, #tpu.memory_space<vmem>>, vector<1x16x64xf32>
      %41 = vector.shape_cast %40 : vector<1x16x64xf32> to vector<16x64xf32>
      %c0_24 = arith.constant 0 : index
      %c0_25 = arith.constant 0 : index
      %42 = vector.load %arg6[%c0_24, %c0_25] : memref<1x64xf32, #tpu.memory_space<vmem>>, vector<1x64xf32>
      %c0_26 = arith.constant 0 : index
      %c0_27 = arith.constant 0 : index
      %43 = vector.load %arg7[%c0_26, %c0_27] : memref<1x64xf32, #tpu.memory_space<vmem>>, vector<1x64xf32>
      %cst_28 = arith.constant dense<0.000000e+00> : vector<16xf32>
      %44 = vector.multi_reduction <add>, %41, %cst_28 [1] : vector<16x64xf32> to vector<16xf32>
      %45 = vector.shape_cast %44 : vector<16xf32> to vector<16x1xf32>
      %cst_29 = arith.constant 6.400000e+01 : f32
      %46 = vector.broadcast %cst_29 : f32 to vector<16x1xf32>
      %47 = arith.divf %45, %46 : vector<16x1xf32>
      %48 = vector.broadcast %47 : vector<16x1xf32> to vector<16x64xf32>
      %49 = arith.subf %41, %48 : vector<16x64xf32>
      %50 = arith.mulf %49, %49 : vector<16x64xf32>
      %cst_30 = arith.constant dense<0.000000e+00> : vector<16xf32>
      %51 = vector.multi_reduction <add>, %50, %cst_30 [1] : vector<16x64xf32> to vector<16xf32>
      %52 = vector.shape_cast %51 : vector<16xf32> to vector<16x1xf32>
      %cst_31 = arith.constant 6.400000e+01 : f32
      %53 = vector.broadcast %cst_31 : f32 to vector<16x1xf32>
      %54 = arith.divf %52, %53 : vector<16x1xf32>
      %55 = vector.broadcast %47 : vector<16x1xf32> to vector<16x64xf32>
      %56 = arith.subf %41, %55 : vector<16x64xf32>
      %cst_32 = arith.constant 9.99999974E-6 : f32
      %57 = vector.broadcast %cst_32 : f32 to vector<16x1xf32>
      %58 = arith.addf %54, %57 : vector<16x1xf32>
      %59 = math.rsqrt %58 : vector<16x1xf32>
      %60 = vector.broadcast %59 : vector<16x1xf32> to vector<16x64xf32>
      %61 = arith.mulf %56, %60 : vector<16x64xf32>
      %62 = vector.broadcast %42 : vector<1x64xf32> to vector<16x64xf32>
      %63 = arith.mulf %61, %62 : vector<16x64xf32>
      %64 = vector.broadcast %43 : vector<1x64xf32> to vector<16x64xf32>
      %65 = arith.addf %63, %64 : vector<16x64xf32>
      %cst_33 = arith.constant dense<0.000000e+00> : vector<64xf32>
      %66 = vector.multi_reduction <add>, %65, %cst_33 [0] : vector<16x64xf32> to vector<64xf32>
      %67 = vector.shape_cast %66 : vector<64xf32> to vector<1x64xf32>
      %cst_34 = arith.constant 1.600000e+01 : f32
      %68 = vector.broadcast %cst_34 : f32 to vector<1x64xf32>
      %69 = arith.divf %67, %68 : vector<1x64xf32>
      %c0_35 = arith.constant 0 : index
      %c0_36 = arith.constant 0 : index
      %70 = vector.load %arg9[%c0_35, %c0_36] : memref<64x32xf32, #tpu.memory_space<vmem>>, vector<64x32xf32>
      %cst_37 = arith.constant dense<0.000000e+00> : vector<1x32xf32>
      %71 = tpu.matmul %69, %70, %cst_37 {dimension_numbers = #tpu.dot_dimension_numbers<[1], [0], [0], [1], [0, 0, 1, 1], [], []>} : vector<1x64xf32>, vector<64x32xf32>, vector<1x32xf32> -> vector<1x32xf32>
      %c0_38 = arith.constant 0 : index
      %c0_39 = arith.constant 0 : index
      %72 = vector.load %arg12[%c0_38, %c0_39] : memref<1x32xf32, #tpu.memory_space<vmem>>, vector<1x32xf32>
      tpu.vector_store %arg12[%c0_38, %c0_39], %71 {strides = array<i32>} : memref<1x32xf32, #tpu.memory_space<vmem>>, vector<1x32xf32>,
    } else {
    }
    %c0 = arith.constant 0 : index
    %c0_1 = arith.constant 0 : index
    %c0_2 = arith.constant 0 : index
    %3 = vector.load %arg2[%c0, %c0_1, %c0_2] : memref<1x8x32xf32, #tpu.memory_space<vmem>>, vector<1x8x32xf32>
    %4 = vector.shape_cast %3 : vector<1x8x32xf32> to vector<8x32xf32>
    %c0_3 = arith.constant 0 : index
    %c0_4 = arith.constant 0 : index
    %5 = vector.load %arg4[%c0_3, %c0_4] : memref<1x32xf32, #tpu.memory_space<vmem>>, vector<1x32xf32>
    %c0_5 = arith.constant 0 : index
    %c0_6 = arith.constant 0 : index
    %6 = vector.load %arg5[%c0_5, %c0_6] : memref<1x32xf32, #tpu.memory_space<vmem>>, vector<1x32xf32>
    %cst = arith.constant dense<0.000000e+00> : vector<8xf32>
    %7 = vector.multi_reduction <add>, %4, %cst [1] : vector<8x32xf32> to vector<8xf32>
    %8 = vector.shape_cast %7 : vector<8xf32> to vector<8x1xf32>
    %cst_7 = arith.constant 3.200000e+01 : f32
    %9 = vector.broadcast %cst_7 : f32 to vector<8x1xf32>
    %10 = arith.divf %8, %9 : vector<8x1xf32>
    %11 = vector.broadcast %10 : vector<8x1xf32> to vector<8x32xf32>
    %12 = arith.subf %4, %11 : vector<8x32xf32>
    %13 = arith.mulf %12, %12 : vector<8x32xf32>
    %cst_8 = arith.constant dense<0.000000e+00> : vector<8xf32>
    %14 = vector.multi_reduction <add>, %13, %cst_8 [1] : vector<8x32xf32> to vector<8xf32>
    %15 = vector.shape_cast %14 : vector<8xf32> to vector<8x1xf32>
    %cst_9 = arith.constant 3.200000e+01 : f32
    %16 = vector.broadcast %cst_9 : f32 to vector<8x1xf32>
    %17 = arith.divf %15, %16 : vector<8x1xf32>
    %18 = vector.broadcast %10 : vector<8x1xf32> to vector<8x32xf32>
    %19 = arith.subf %4, %18 : vector<8x32xf32>
    %cst_10 = arith.constant 9.99999974E-6 : f32
    %20 = vector.broadcast %cst_10 : f32 to vector<8x1xf32>
    %21 = arith.addf %17, %20 : vector<8x1xf32>
    %22 = math.rsqrt %21 : vector<8x1xf32>
    %23 = vector.broadcast %22 : vector<8x1xf32> to vector<8x32xf32>
    %24 = arith.mulf %19, %23 : vector<8x32xf32>
    %25 = vector.broadcast %5 : vector<1x32xf32> to vector<8x32xf32>
    %26 = arith.mulf %24, %25 : vector<8x32xf32>
    %27 = vector.broadcast %6 : vector<1x32xf32> to vector<8x32xf32>
    %28 = arith.addf %26, %27 : vector<8x32xf32>
    %c0_11 = arith.constant 0 : index
    %c0_12 = arith.constant 0 : index
    %29 = vector.load %arg8[%c0_11, %c0_12] : memref<32x32xf32, #tpu.memory_space<vmem>>, vector<32x32xf32>
    %cst_13 = arith.constant dense<0.000000e+00> : vector<8x32xf32>
    %30 = tpu.matmul %28, %29, %cst_13 {dimension_numbers = #tpu.dot_dimension_numbers<[1], [0], [0], [1], [0, 0, 1, 1], [], []>} : vector<8x32xf32>, vector<32x32xf32>, vector<8x32xf32> -> vector<8x32xf32>
    %c0_14 = arith.constant 0 : index
    %c0_15 = arith.constant 0 : index
    %31 = vector.load %arg12[%c0_14, %c0_15] : memref<1x32xf32, #tpu.memory_space<vmem>>, vector<1x32xf32>
    %32 = vector.broadcast %31 : vector<1x32xf32> to vector<8x32xf32>
    %33 = arith.addf %30, %32 : vector<8x32xf32>
    %c0_16 = arith.constant 0 : index
    %c0_17 = arith.constant 0 : index
    %34 = vector.load %arg10[%c0_16, %c0_17] : memref<1x32xf32, #tpu.memory_space<vmem>>, vector<1x32xf32>
    %35 = vector.broadcast %34 : vector<1x32xf32> to vector<8x32xf32>
    %36 = arith.addf %33, %35 : vector<8x32xf32>
    %c0_18 = arith.constant 0 : index
    %c0_19 = arith.constant 0 : index
    %c0_20 = arith.constant 0 : index
    %37 = vector.load %arg11[%c0_18, %c0_19, %c0_20] : memref<1x8x32xf32, #tpu.memory_space<vmem>>, vector<1x8x32xf32>
    %38 = vector.shape_cast %37 : vector<1x8x32xf32> to vector<8x32xf32>
    %39 = vector.shape_cast %36 : vector<8x32xf32> to vector<1x8x32xf32>
    tpu.vector_store %arg11[%c0_18, %c0_19, %c0_20], %39 {strides = array<i32>} : memref<1x8x32xf32, #tpu.memory_space<vmem>>, vector<1x8x32xf32>,
    return
  }
  func.func @transform_0(%arg0: i32, %arg1: i32) -> (i32, i32, i32) {
    %c0_i32 = arith.constant 0 : i32
    %c0_i32_0 = arith.constant 0 : i32
    return %arg0, %arg1, %c0_i32 : i32, i32, i32
  }
  func.func @transform_1(%arg0: i32, %arg1: i32) -> (i32, i32, i32) {
    %c0_i32 = arith.constant 0 : i32
    %c0_i32_0 = arith.constant 0 : i32
    %c0_i32_1 = arith.constant 0 : i32
    return %arg0, %c0_i32, %c0_i32_0 : i32, i32, i32
  }
  func.func @transform_2(%arg0: i32, %arg1: i32) -> (i32, i32) {
    %c0_i32 = arith.constant 0 : i32
    %c0_i32_0 = arith.constant 0 : i32
    %c0_i32_1 = arith.constant 0 : i32
    return %c0_i32, %c0_i32_0 : i32, i32
  }
  func.func @transform_3(%arg0: i32, %arg1: i32) -> (i32, i32) {
    %c0_i32 = arith.constant 0 : i32
    %c0_i32_0 = arith.constant 0 : i32
    %c0_i32_1 = arith.constant 0 : i32
    return %c0_i32, %c0_i32_0 : i32, i32
  }
  func.func @transform_4(%arg0: i32, %arg1: i32) -> (i32, i32) {
    %c0_i32 = arith.constant 0 : i32
    %c0_i32_0 = arith.constant 0 : i32
    %c0_i32_1 = arith.constant 0 : i32
    return %c0_i32, %c0_i32_0 : i32, i32
  }
  func.func @transform_5(%arg0: i32, %arg1: i32) -> (i32, i32) {
    %c0_i32 = arith.constant 0 : i32
    %c0_i32_0 = arith.constant 0 : i32
    %c0_i32_1 = arith.constant 0 : i32
    return %c0_i32, %c0_i32_0 : i32, i32
  }
  func.func @transform_6(%arg0: i32, %arg1: i32) -> (i32, i32) {
    %c0_i32 = arith.constant 0 : i32
    %c0_i32_0 = arith.constant 0 : i32
    %c0_i32_1 = arith.constant 0 : i32
    return %c0_i32, %c0_i32_0 : i32, i32
  }
  func.func @transform_7(%arg0: i32, %arg1: i32) -> (i32, i32) {
    %c0_i32 = arith.constant 0 : i32
    %c0_i32_0 = arith.constant 0 : i32
    %c0_i32_1 = arith.constant 0 : i32
    return %c0_i32, %c0_i32_0 : i32, i32
  }
  func.func @transform_8(%arg0: i32, %arg1: i32) -> (i32, i32) {
    %c0_i32 = arith.constant 0 : i32
    %c0_i32_0 = arith.constant 0 : i32
    %c0_i32_1 = arith.constant 0 : i32
    return %c0_i32, %c0_i32_0 : i32, i32
  }
  func.func @transform_9(%arg0: i32, %arg1: i32) -> (i32, i32, i32) {
    %c0_i32 = arith.constant 0 : i32
    %c0_i32_0 = arith.constant 0 : i32
    return %arg0, %arg1, %c0_i32 : i32, i32, i32
  }
}

</mosaic_0001>

<llo_original>
// kernel: tpu_custom_call.1
$region0: #{tpu_custom_call.1}
  #allocation0 [shape = 'u32[]', space=smem, size = 0x4, offset = 0x4, fixed_abs, tag = 'smem constant byte address 0x4 - core index']
  #allocation1 [shape = 'u32[144,128]{1,0:T(1,128)}', space=vmem, size = 0x12000, scoped, tag = 'internal scratch']
  #allocation2 [shape = 'f32[1,32]{1,0:T(1,128)}', space=vmem, size = 0x200, scoped, tag = 'scratch operand']
  %s0 = inlined_call_operand.vmem [shape: f32[2,8,32], index: 0, kind: input, shape index: {}]
  %s1 = inlined_call_operand.vmem [shape: f32[2,16,64], index: 1, kind: input, shape index: {}]
  %s2 = inlined_call_operand.vmem [shape: f32[1,32], index: 2, kind: input, shape index: {}]
  %s3 = inlined_call_operand.vmem [shape: f32[1,32], index: 3, kind: input, shape index: {}]
  %s4 = inlined_call_operand.vmem [shape: f32[1,64], index: 4, kind: input, shape index: {}]
  %s5 = inlined_call_operand.vmem [shape: f32[1,64], index: 5, kind: input, shape index: {}]
  %s6 = inlined_call_operand.vmem [shape: f32[32,32], index: 6, kind: input, shape index: {}]
  %s7 = inlined_call_operand.vmem [shape: f32[64,32], index: 7, kind: input, shape index: {}]
  %s8 = inlined_call_operand.vmem [shape: f32[1,32], index: 8, kind: input, shape index: {}]
  %s9 = inlined_call_operand.hbm [shape: f32[2,8,32], index: 9, kind: output, shape index: {}]
  %s10 = sld [smem:[#allocation0]]
  $region73: #{tpu_custom_call.1} parent=0
    _
  %s12 = ssub.s32 1, %s10
  %s13 = scalar_select 0, %s12, %s10
  $region1: #{tpu_custom_call.1} parent=0
    #allocation3 [shape = 'u8[8192]{0}', space=vmem, size = 0x2000, scoped, tag = 'output window, operand 0']
    #allocation4 [shape = 's32[2]{0}', space=sflag, size = 0x8, scoped, tag = 'scoped memory for tpu_custom_call.1']
    %14 = vsyncpa [#allocation4], 0
    %s15 = scalar_lea.sflag [#allocation4], 1
    %16 = vsyncpa %s15, 0
    loop: start=0, step=1, limit=4
    $region2: #{tpu_custom_call.1} parent=1 // loop_pre_header
      _
    $region3: #{tpu_custom_call.1} parent=1 // loop_header
      %s18 = sphi 0, %s22
      %p19 = scmp.ge.s32.totalorder %s18, 4
      %s25 = sphi 0, %s37
      %s26 = sphi 0, %s33
      %s27 = sphi 0, %s25
      %s28 = sphi 0, %s26
      %s29 = sphi 0, %s27
      %s30 = sphi 0, %s28
      %s42 = sphi 0, %s44
      %s45 = sphi 0, %s42
      %s46 = sphi 0, %s45
      %s62 = sphi 0, %s46
      %s68 = sphi 0, %s70
      %s71 = sphi 0, %s68
      %s72 = sphi 0, %s71
      %s88 = sphi 0, %s72
      %s92 = sphi 0, %s92
      %s94 = sphi 0, %s92
      %s95 = sphi 0, %s94
      %s109 = sphi 0, %s95
      %s113 = sphi 0, %s113
      %s115 = sphi 0, %s113
      %s116 = sphi 0, %s115
      %s130 = sphi 0, %s116
      %s134 = sphi 0, %s134
      %s136 = sphi 0, %s134
      %s137 = sphi 0, %s136
      %s151 = sphi 0, %s137
      %s155 = sphi 0, %s155
      %s157 = sphi 0, %s155
      %s158 = sphi 0, %s157
      %s172 = sphi 0, %s158
      %s176 = sphi 0, %s176
      %s178 = sphi 0, %s176
      %s179 = sphi 0, %s178
      %s193 = sphi 0, %s179
      %s197 = sphi 0, %s197
      %s199 = sphi 0, %s197
      %s200 = sphi 0, %s199
      %s214 = sphi 0, %s200
      %s218 = sphi 0, %s218
      %s220 = sphi 0, %s218
      %s221 = sphi 0, %s220
      %s235 = sphi 0, %s221
      %s243 = sphi 0, %s245
      %s246 = sphi 0, %s243
      %s247 = sphi 0, %s246
      %s263 = sphi 0, %s247
    $region4: #{tpu_custom_call.1} parent=1 // loop_header_branch
      %21 = sbr.rel (%p19) target = $region8
    $region5: #{tpu_custom_call.1} parent=1 // loop_body
      %s23 = ssub.s32 %s18, 1
      %s24 = ssub.s32 %s18, 2
      %s31 = sadd.s32 1, %s26
      %p32 = scmp.ge.s32.totalorder %s31, 1
      %s33 = scalar_select %p32, 0, %s31
      %s34 = sadd.s32 1, %s25
      %s35 = scalar_select %p32, %s34, %s25
      %p36 = scmp.ge.s32.totalorder %s35, 2
      %s37 = scalar_select %p36, 0, %s35
      %s38 = ssub.s32 %s25, %s37
      %s39 = ssub.s32 %s26, %s33
      %s40 = sor.u32 %s38, %s39
      %p41 = scmp.eq.s32.totalorder %s40, 0
      %s43 = sadd.s32 %s42, 1
      %s44 = scalar_select %p41, %s42, %s43
      %p47 = pneg %p41
      %p48 = scmp.eq.s32.totalorder %s18, 1
      %p49 = por %p47, %p48
      %p50 = scmp.ne.s32.totalorder %s42, %s45
      %p51 = scmp.eq.s32.totalorder %s18, 0
      %p52 = por %p50, %p51
      %p53 = scmp.ne.s32.totalorder %s42, %s45
      %p54 = scmp.eq.s32.totalorder %s23, 1
      %p55 = por %p53, %p54
      %p56 = scmp.ne.s32.totalorder %s45, %s46
      %p57 = scmp.eq.s32.totalorder %s23, 0
      %p58 = por %p56, %p57
      %p59 = scmp.ne.s32.totalorder %s45, %s46
      %p60 = scmp.eq.s32.totalorder %s24, 1
      %p61 = por %p59, %p60
      %p63 = scmp.ne.s32.totalorder %s46, %s62
      %p64 = scmp.eq.s32.totalorder %s24, 0
      %p65 = por %p63, %p64
      %s66 = ssub.s32 %s25, %s37
      %p67 = scmp.eq.s32.totalorder %s66, 0
      %s69 = sadd.s32 %s68, 1
      %s70 = scalar_select %p67, %s68, %s69
      %p73 = pneg %p67
      %p74 = scmp.eq.s32.totalorder %s18, 1
      %p75 = por %p73, %p74
      %p76 = scmp.ne.s32.totalorder %s68, %s71
      %p77 = scmp.eq.s32.totalorder %s18, 0
      %p78 = por %p76, %p77
      %p79 = scmp.ne.s32.totalorder %s68, %s71
      %p80 = scmp.eq.s32.totalorder %s23, 1
      %p81 = por %p79, %p80
      %p82 = scmp.ne.s32.totalorder %s71, %s72
      %p83 = scmp.eq.s32.totalorder %s23, 0
      %p84 = por %p82, %p83
      %p85 = scmp.ne.s32.totalorder %s71, %s72
      %p86 = scmp.eq.s32.totalorder %s24, 1
      %p87 = por %p85, %p86
      %p89 = scmp.ne.s32.totalorder %s72, %s88
      %p90 = scmp.eq.s32.totalorder %s24, 0
      %p91 = por %p89, %p90
      %s93 = sadd.s32 %s92, 1
      %p96 = scmp.eq.s32.totalorder %s18, 1
      %p97 = scmp.ne.s32.totalorder %s92, %s94
      %p98 = scmp.eq.s32.totalorder %s18, 0
      %p99 = por %p97, %p98
      %p100 = scmp.ne.s32.totalorder %s92, %s94
      %p101 = scmp.eq.s32.totalorder %s23, 1
      %p102 = por %p100, %p101
      %p103 = scmp.ne.s32.totalorder %s94, %s95
      %p104 = scmp.eq.s32.totalorder %s23, 0
      %p105 = por %p103, %p104
      %p106 = scmp.ne.s32.totalorder %s94, %s95
      %p107 = scmp.eq.s32.totalorder %s24, 1
      %p108 = por %p106, %p107
      %p110 = scmp.ne.s32.totalorder %s95, %s109
      %p111 = scmp.eq.s32.totalorder %s24, 0
      %p112 = por %p110, %p111
      %s114 = sadd.s32 %s113, 1
      %p117 = scmp.eq.s32.totalorder %s18, 1
      %p118 = scmp.ne.s32.totalorder %s113, %s115
      %p119 = scmp.eq.s32.totalorder %s18, 0
      %p120 = por %p118, %p119
      %p121 = scmp.ne.s32.totalorder %s113, %s115
      %p122 = scmp.eq.s32.totalorder %s23, 1
      %p123 = por %p121, %p122
      %p124 = scmp.ne.s32.totalorder %s115, %s116
      %p125 = scmp.eq.s32.totalorder %s23, 0
      %p126 = por %p124, %p125
      %p127 = scmp.ne.s32.totalorder %s115, %s116
      %p128 = scmp.eq.s32.totalorder %s24, 1
      %p129 = por %p127, %p128
      %p131 = scmp.ne.s32.totalorder %s116, %s130
      %p132 = scmp.eq.s32.totalorder %s24, 0
      %p133 = por %p131, %p132
      %s135 = sadd.s32 %s134, 1
      %p138 = scmp.eq.s32.totalorder %s18, 1
      %p139 = scmp.ne.s32.totalorder %s134, %s136
      %p140 = scmp.eq.s32.totalorder %s18, 0
      %p141 = por %p139, %p140
      %p142 = scmp.ne.s32.totalorder %s134, %s136
      %p143 = scmp.eq.s32.totalorder %s23, 1
      %p144 = por %p142, %p143
      %p145 = scmp.ne.s32.totalorder %s136, %s137
      %p146 = scmp.eq.s32.totalorder %s23, 0
      %p147 = por %p145, %p146
      %p148 = scmp.ne.s32.totalorder %s136, %s137
      %p149 = scmp.eq.s32.totalorder %s24, 1
      %p150 = por %p148, %p149
      %p152 = scmp.ne.s32.totalorder %s137, %s151
      %p153 = scmp.eq.s32.totalorder %s24, 0
      %p154 = por %p152, %p153
      %s156 = sadd.s32 %s155, 1
      %p159 = scmp.eq.s32.totalorder %s18, 1
      %p160 = scmp.ne.s32.totalorder %s155, %s157
      %p161 = scmp.eq.s32.totalorder %s18, 0
      %p162 = por %p160, %p161
      %p163 = scmp.ne.s32.totalorder %s155, %s157
      %p164 = scmp.eq.s32.totalorder %s23, 1
      %p165 = por %p163, %p164
      %p166 = scmp.ne.s32.totalorder %s157, %s158
      %p167 = scmp.eq.s32.totalorder %s23, 0
      %p168 = por %p166, %p167
      %p169 = scmp.ne.s32.totalorder %s157, %s158
      %p170 = scmp.eq.s32.totalorder %s24, 1
      %p171 = por %p169, %p170
      %p173 = scmp.ne.s32.totalorder %s158, %s172
      %p174 = scmp.eq.s32.totalorder %s24, 0
      %p175 = por %p173, %p174
      %s177 = sadd.s32 %s176, 1
      %p180 = scmp.eq.s32.totalorder %s18, 1
      %p181 = scmp.ne.s32.totalorder %s176, %s178
      %p182 = scmp.eq.s32.totalorder %s18, 0
      %p183 = por %p181, %p182
      %p184 = scmp.ne.s32.totalorder %s176, %s178
      %p185 = scmp.eq.s32.totalorder %s23, 1
      %p186 = por %p184, %p185
      %p187 = scmp.ne.s32.totalorder %s178, %s179
      %p188 = scmp.eq.s32.totalorder %s23, 0
      %p189 = por %p187, %p188
      %p190 = scmp.ne.s32.totalorder %s178, %s179
      %p191 = scmp.eq.s32.totalorder %s24, 1
      %p192 = por %p190, %p191
      %p194 = scmp.ne.s32.totalorder %s179, %s193
      %p195 = scmp.eq.s32.totalorder %s24, 0
      %p196 = por %p194, %p195
      %s198 = sadd.s32 %s197, 1
      %p201 = scmp.eq.s32.totalorder %s18, 1
      %p202 = scmp.ne.s32.totalorder %s197, %s199
      %p203 = scmp.eq.s32.totalorder %s18, 0
      %p204 = por %p202, %p203
      %p205 = scmp.ne.s32.totalorder %s197, %s199
      %p206 = scmp.eq.s32.totalorder %s23, 1
      %p207 = por %p205, %p206
      %p208 = scmp.ne.s32.totalorder %s199, %s200
      %p209 = scmp.eq.s32.totalorder %s23, 0
      %p210 = por %p208, %p209
      %p211 = scmp.ne.s32.totalorder %s199, %s200
      %p212 = scmp.eq.s32.totalorder %s24, 1
      %p213 = por %p211, %p212
      %p215 = scmp.ne.s32.totalorder %s200, %s214
      %p216 = scmp.eq.s32.totalorder %s24, 0
      %p217 = por %p215, %p216
      %s219 = sadd.s32 %s218, 1
      %p222 = scmp.eq.s32.totalorder %s18, 1
      %p223 = scmp.ne.s32.totalorder %s218, %s220
      %p224 = scmp.eq.s32.totalorder %s18, 0
      %p225 = por %p223, %p224
      %p226 = scmp.ne.s32.totalorder %s218, %s220
      %p227 = scmp.eq.s32.totalorder %s23, 1
      %p228 = por %p226, %p227
      %p229 = scmp.ne.s32.totalorder %s220, %s221
      %p230 = scmp.eq.s32.totalorder %s23, 0
      %p231 = por %p229, %p230
      %p232 = scmp.ne.s32.totalorder %s220, %s221
      %p233 = scmp.eq.s32.totalorder %s24, 1
      %p234 = por %p232, %p233
      %p236 = scmp.ne.s32.totalorder %s221, %s235
      %p237 = scmp.eq.s32.totalorder %s24, 0
      %p238 = por %p236, %p237
      %s239 = ssub.s32 %s25, %s37
      %s240 = ssub.s32 %s26, %s33
      %s241 = sor.u32 %s239, %s240
      %p242 = scmp.eq.s32.totalorder %s241, 0
      %s244 = sadd.s32 %s243, 1
      %s245 = scalar_select %p242, %s243, %s244
      %p248 = pneg %p242
      %p249 = scmp.eq.s32.totalorder %s18, 1
      %p250 = por %p248, %p249
      %p251 = scmp.ne.s32.totalorder %s243, %s246
      %p252 = scmp.eq.s32.totalorder %s18, 0
      %p253 = por %p251, %p252
      %p254 = scmp.ne.s32.totalorder %s243, %s246
      %p255 = scmp.eq.s32.totalorder %s23, 1
      %p256 = por %p254, %p255
      %p257 = scmp.ne.s32.totalorder %s246, %s247
      %p258 = scmp.eq.s32.totalorder %s23, 0
      %p259 = por %p257, %p258
      %p260 = scmp.ne.s32.totalorder %s246, %s247
      %p261 = scmp.eq.s32.totalorder %s24, 1
      %p262 = por %p260, %p261
      %p264 = scmp.ne.s32.totalorder %s247, %s263
      %p265 = scmp.eq.s32.totalorder %s24, 0
      %p266 = por %p264, %p265
      %p267 = scmp.le.s32.totalorder 1, %s18
      %p268 = scmp.lt.s32.totalorder %s18, 3
      %p269 = pnand %p267, %p268
      %p270 = pneg %p269
      // Predicated region
      $region9: #{tpu_custom_call.1} parent=5 // pred_check
        _
      $region10: #{tpu_custom_call.1} parent=5 // pred_check_branch
        %272 = sbr.rel (%p269) target = $region12
      $region11: #{tpu_custom_call.1} parent=5 // pred_region
        %s273 = ssub.s32 %s18, 1
        // Predicated region
        $region13: #{tpu_custom_call.1} parent=11 // pred_check
          %p274 = pneg %p105
        $region14: #{tpu_custom_call.1} parent=11 // pred_check_branch
          %276 = sbr.rel (%p274) target = $region16
        $region15: #{tpu_custom_call.1} parent=11 // pred_region
          _
        $region16: #{tpu_custom_call.1} parent=11 // pred_fallthru
          _
        // Predicated region
        $region17: #{tpu_custom_call.1} parent=11 // pred_check
          %p277 = pneg %p126
        $region18: #{tpu_custom_call.1} parent=11 // pred_check_branch
          %279 = sbr.rel (%p277) target = $region20
        $region19: #{tpu_custom_call.1} parent=11 // pred_region
          _
        $region20: #{tpu_custom_call.1} parent=11 // pred_fallthru
          _
        // Predicated region
        $region21: #{tpu_custom_call.1} parent=11 // pred_check
          %p280 = pneg %p147
        $region22: #{tpu_custom_call.1} parent=11 // pred_check_branch
          %282 = sbr.rel (%p280) target = $region24
        $region23: #{tpu_custom_call.1} parent=11 // pred_region
          _
        $region24: #{tpu_custom_call.1} parent=11 // pred_fallthru
          _
        // Predicated region
        $region25: #{tpu_custom_call.1} parent=11 // pred_check
          %p283 = pneg %p168
        $region26: #{tpu_custom_call.1} parent=11 // pred_check_branch
          %285 = sbr.rel (%p283) target = $region28
        $region27: #{tpu_custom_call.1} parent=11 // pred_region
          _
        $region28: #{tpu_custom_call.1} parent=11 // pred_fallthru
          _
        // Predicated region
        $region29: #{tpu_custom_call.1} parent=11 // pred_check
          %p286 = pneg %p189
        $region30: #{tpu_custom_call.1} parent=11 // pred_check_branch
          %288 = sbr.rel (%p286) target = $region32
        $region31: #{tpu_custom_call.1} parent=11 // pred_region
          _
        $region32: #{tpu_custom_call.1} parent=11 // pred_fallthru
          _
        // Predicated region
        $region33: #{tpu_custom_call.1} parent=11 // pred_check
          %p289 = pneg %p210
        $region34: #{tpu_custom_call.1} parent=11 // pred_check_branch
          %291 = sbr.rel (%p289) target = $region36
        $region35: #{tpu_custom_call.1} parent=11 // pred_region
          _
        $region36: #{tpu_custom_call.1} parent=11 // pred_fallthru
          _
        // Predicated region
        $region37: #{tpu_custom_call.1} parent=11 // pred_check
          %p292 = pneg %p231
        $region38: #{tpu_custom_call.1} parent=11 // pred_check_branch
          %294 = sbr.rel (%p292) target = $region40
        $region39: #{tpu_custom_call.1} parent=11 // pred_region
          _
        $region40: #{tpu_custom_call.1} parent=11 // pred_fallthru
          _
      $region12: #{tpu_custom_call.1} parent=5 // pred_fallthru
        _
      %p295 = scmp.lt.s32.totalorder %s18, 2
      // Predicated region
      $region41: #{tpu_custom_call.1} parent=5 // pred_check
        %p296 = pneg %p295
      $region42: #{tpu_custom_call.1} parent=5 // pred_check_branch
        %298 = sbr.rel (%p296) target = $region44
      $region43: #{tpu_custom_call.1} parent=5 // pred_region
        // Predicated region
        $region45: #{tpu_custom_call.1} parent=43 // pred_check
          %p299 = pneg %p52
        $region46: #{tpu_custom_call.1} parent=43 // pred_check_branch
          %301 = sbr.rel (%p299) target = $region48
        $region47: #{tpu_custom_call.1} parent=43 // pred_region
          %p302 = scmp.lt.s32.totalorder %s25, 1
          %s303 = scalar_select %p302, %s25, 1
          %p304 = scmp.lt.s32.totalorder %s26, 0
          %s305 = scalar_select %p304, %s26, 0
          %s306 = sadd.s32 %s305, %s303
          %s307 = smul.addr %s306, 8
          %s308 = scalar_lea.vmem %s0, %s307
        $region48: #{tpu_custom_call.1} parent=43 // pred_fallthru
          _
        // Predicated region
        $region49: #{tpu_custom_call.1} parent=43 // pred_check
          %p309 = pneg %p78
        $region50: #{tpu_custom_call.1} parent=43 // pred_check_branch
          %311 = sbr.rel (%p309) target = $region52
        $region51: #{tpu_custom_call.1} parent=43 // pred_region
          %p312 = scmp.lt.s32.totalorder %s25, 1
          %s313 = scalar_select %p312, %s25, 1
          %s314 = smul.addr %s313, 2
          %s315 = smul.addr %s314, 8
          %s316 = scalar_lea.vmem %s1, %s315
        $region52: #{tpu_custom_call.1} parent=43 // pred_fallthru
          _
      $region44: #{tpu_custom_call.1} parent=5 // pred_fallthru
        _
      %p317 = scmp.le.s32.totalorder 1, %s18
      %p318 = scmp.lt.s32.totalorder %s18, 3
      %p319 = pnand %p317, %p318
      %p320 = pneg %p319
      // Predicated region
      $region53: #{tpu_custom_call.1} parent=5 // pred_check
        _
      $region54: #{tpu_custom_call.1} parent=5 // pred_check_branch
        %322 = sbr.rel (%p319) target = $region56
      $region55: #{tpu_custom_call.1} parent=5 // pred_region
        %s323 = ssub.s32 %s18, 1
        %p324 = scmp.lt.s32.totalorder %s27, 1
        %s325 = scalar_select %p324, %s27, 1
        %p326 = scmp.lt.s32.totalorder %s28, 0
        %s327 = scalar_select %p326, %s28, 0
        %s328 = sadd.s32 %s327, %s325
        %s329 = smul.addr %s328, 8
        %s330 = scalar_lea.vmem %s0, %s329
        %p331 = pneg %p58
        %p332 = pneg %p55
        %p333 = scmp.lt.s32.totalorder %s27, 1
        %s334 = scalar_select %p333, %s27, 1
        %s335 = smul.addr %s334, 2
        %s336 = smul.addr %s335, 8
        %s337 = scalar_lea.vmem %s1, %s336
        %p338 = pneg %p84
        %p339 = pneg %p81
        %p340 = pneg %p105
        %p341 = pneg %p102
        %p342 = pneg %p126
        %p343 = pneg %p123
        %p344 = pneg %p147
        %p345 = pneg %p144
        %p346 = pneg %p168
        %p347 = pneg %p165
        %p348 = pneg %p189
        %p349 = pneg %p186
        %p350 = pneg %p210
        %p351 = pneg %p207
        %p352 = pneg %p231
        %p353 = pneg %p228
        %p354 = pneg %p259
        %p355 = pneg %p256
        %s356 = sand.u32 %s246, 1
        %s357 = scalar_lea.sflag [#allocation4], %s356
        %s358 = sand.u32 %s246, 1
        %s359 = smul.addr %s358, 8
        %s360 = scalar_lea.vmem [#allocation3], %s359
        %p361 = scmp.lt.s32.totalorder %s27, 1
        %s362 = scalar_select %p361, %s27, 1
        %p363 = scmp.lt.s32.totalorder %s28, 0
        %s364 = scalar_select %p363, %s28, 0
        %s365 = sadd.s32 %s364, %s362
        %s366 = smul.addr %s365, 8
        %s367 = scalar_lea.vmem %s0, %s366
        %p368 = scmp.lt.s32.totalorder %s27, 1
        %s369 = scalar_select %p368, %s27, 1
        %s370 = smul.addr %s369, 2
        %s371 = smul.addr %s370, 8
        %s372 = scalar_lea.vmem %s1, %s371
        %p373 = scmp.eq.s32.totalorder %s28, 0
        // Predicated region
        $region57: #{tpu_custom_call.1} parent=55 // pred_check
          %p374 = pneg %p373
        $region58: #{tpu_custom_call.1} parent=55 // pred_check_branch
          %376 = sbr.rel (%p374) target = $region60
        $region59: #{tpu_custom_call.1} parent=55 // pred_region
          %v377 = vld [vmem:[%s372] sm:$0xff]
          %v378 = vld [vmem:[%s372 + $0x8] sm:$0xff]
          %v379 = vld [vmem:[%s4] sm:$0x1]
          %v380 = vld [vmem:[%s5] sm:$0x1]
          %vm381 = vcmask 523264
          %v382 = vsel %vm381, %v377, 0.0
          %383 = vadd.xlane.f32.xlu0 %v382
          %v384 = vpop.xlane.xlu0 %383
          %v385 = vsel %vm381, %v378, 0.0
          %386 = vadd.xlane.f32.xlu0 %v385
          %v387 = vpop.xlane.xlu0 %386
          %v388 = vrcp.pop 64.0
          %v389 = vmul.f32 %v384, %v388
          %v390 = vmul.f32 %v387, %v388
          %v391 = vsub.f32 %v377, %v389
          %v392 = vsub.f32 %v378, %v390
          %v393 = vmul.f32 %v391, %v391
          %v394 = vmul.f32 %v392, %v392
          %v395 = vsel %vm381, %v393, 0.0
          %396 = vadd.xlane.f32.xlu0 %v395
          %v397 = vpop.xlane.xlu0 %396
          %v398 = vsel %vm381, %v394, 0.0
          %399 = vadd.xlane.f32.xlu0 %v398
          %v400 = vpop.xlane.xlu0 %399
          %v401 = vmul.f32 %v397, %v388
          %v402 = vmul.f32 %v400, %v388
          %v403 = vadd.f32 %v401, 1e-05
          %v404 = vadd.f32 %v402, 1e-05
          %v405 = vrsqrt.pop %v403
          %v406 = vrsqrt.pop %v404
          %v407 = vmul.f32 %v391, %v405
          %v408 = vmul.f32 %v392, %v406
          %v410 = vlaneseq
          %v411 = vshrl.u32 %v410, 7
          %v412 = vsub.s32 0, %v411
          %v413 = vrot.slane %v379, %v412
          %v415 = vmul.f32 %v407, %v413
          %v416 = vmul.f32 %v408, %v413
          %v418 = vlaneseq
          %v419 = vshrl.u32 %v418, 7
          %v420 = vsub.s32 0, %v419
          %v421 = vrot.slane %v380, %v420
          %v423 = vadd.f32 %v415, %v421
          %v424 = vadd.f32 %v416, %v421
          %v425 = vsel %vm381, %v423, 0.0
          %v426 = vsel %vm381, %v424, 0.0
          %v427 = vadd.f32 %v425, %v426
          %v428 = vrot.slane %v427, 4
          %v429 = vadd.f32 %v427, %v428
          %v430 = vrot.slane %v429, 2
          %v431 = vadd.f32 %v429, %v430
          %v432 = vrot.slane %v431, 1
          %v433 = vadd.f32 %v431, %v432
          %v434 = vrcp.pop 16.0
          %v435 = vmul.f32 %v433, %v434
          %v436 = vld [vmem:[%s7] sm:$0xff]
          %v437 = vld [vmem:[%s7 + $0x8] sm:$0xff]
          %v438 = vld [vmem:[%s7 + $0x10] sm:$0xff]
          %v439 = vld [vmem:[%s7 + $0x18] sm:$0xff]
          %v440 = vld [vmem:[%s7 + $0x20] sm:$0xff]
          %v441 = vld [vmem:[%s7 + $0x28] sm:$0xff]
          %v442 = vld [vmem:[%s7 + $0x30] sm:$0xff]
          %v443 = vld [vmem:[%s7 + $0x38] sm:$0xff]
          %v445 = vsel %vm381, %v435, 0
          %447 = vmatprep.subr.mxu0 0.0
          %448 = vmatpush1.msra.mxu0 %v436
          %449 = vmatprep.subr.mxu0 0.0
          %450 = vmatpush1.msra.mxu0 %v437
          %451 = vmatprep.subr.mxu0 0.0
          %452 = vmatpush1.msra.mxu0 %v438
          %453 = vmatprep.subr.mxu0 0.0
          %454 = vmatpush1.msra.mxu0 %v439
          %455 = vmatprep.subr.mxu0 0.0
          %456 = vmatpush1.msra.mxu0 %v440
          %457 = vmatprep.subr.mxu0 0.0
          %458 = vmatpush1.msra.mxu0 %v441
          %459 = vmatprep.subr.mxu0 0.0
          %460 = vmatpush1.msra.mxu0 %v442
          %461 = vmatprep.subr.mxu0 0.0
          %462 = vmatpush1.msra.mxu0 %v443
          %463 = vmatprep.subr.mxu0 0.0
          %464 = vmatpush1.msra.mxu0 0.0
          %465 = vmatprep.subr.mxu0 0.0
          %466 = vmatpush1.msra.mxu0 0.0
          %467 = vmatprep.subr.mxu0 0.0
          %468 = vmatpush1.msra.mxu0 0.0
          %469 = vmatprep.subr.mxu0 0.0
          %470 = vmatpush1.msra.mxu0 0.0
          %471 = vmatprep.subr.mxu0 0.0
          %472 = vmatpush1.msra.mxu0 0.0
          %473 = vmatprep.subr.mxu0 0.0
          %474 = vmatpush1.msra.mxu0 0.0
          %475 = vmatprep.subr.mxu0 0.0
          %476 = vmatpush1.msra.mxu0 0.0
          %477 = vmatprep.subr.mxu0 0.0
          %478 = vmatpush1.msra.mxu0 0.0
          %479 = vmatprep.subr.mxu0 0.0
          %480 = vmatpush1.msra.mxu0 0.0
          %481 = vmatprep.subr.mxu0 0.0
          %482 = vmatpush1.msra.mxu0 0.0
          %483 = vmatprep.subr.mxu0 0.0
          %484 = vmatpush1.msra.mxu0 0.0
          %485 = vmatprep.subr.mxu0 0.0
          %486 = vmatpush1.msra.mxu0 0.0
          %487 = vmatprep.subr.mxu0 0.0
          %488 = vmatpush1.msra.mxu0 0.0
          %489 = vmatprep.subr.mxu0 0.0
          %490 = vmatpush1.msra.mxu0 0.0
          %491 = vmatprep.subr.mxu0 0.0
          %492 = vmatpush1.msra.mxu0 0.0
          %493 = vmatprep.subr.mxu0 0.0
          %494 = vmatpush1.msra.mxu0 0.0
          %495 = vmatprep.subr.mxu0 0.0
          %496 = vmatpush1.msra.mxu0 0.0
          %497 = vmatprep.subr.mxu0 0.0
          %498 = vmatpush1.msra.mxu0 0.0
          %499 = vmatprep.subr.mxu0 0.0
          %500 = vmatpush1.msra.mxu0 0.0
          %501 = vmatprep.subr.mxu0 0.0
          %502 = vmatpush1.msra.mxu0 0.0
          %503 = vmatprep.subr.mxu0 0.0
          %504 = vmatpush1.msra.mxu0 0.0
          %505 = vmatprep.subr.mxu0 0.0
          %506 = vmatpush1.msra.mxu0 0.0
          %507 = vmatprep.subr.mxu0 0.0
          %508 = vmatpush1.msra.mxu0 0.0
          %509 = vmatprep.subr.mxu0 0.0
          %510 = vmatpush1.msra.mxu0 0.0
          %511 = vmatprep.mubr.f32.mxu0 0.0
          %512 = vmatmul.mubr.f32.gmra.mrb[0].mxu0 %v445
          %v513 = vpop.f32.mrb[0].mxu0
          %v514 = vadd.f32 0.0, %v513
          %v515 = vpop.f32.mrb[0].mxu0
          %516 = vdwg.mxu0
          %vm517 = vcmask 253952
          %518 = vst.msk [vmem:[#allocation2] sm:$0x1] %vm517, %v514
        $region60: #{tpu_custom_call.1} parent=55 // pred_fallthru
          _
        %v519 = vld [vmem:[%s367] sm:$0xff]
        %v520 = vld [vmem:[%s2] sm:$0x1]
        %v521 = vld [vmem:[%s3] sm:$0x1]
        %vm522 = vcmask 261120
        %v523 = vsel %vm522, %v519, 0.0
        %524 = vadd.xlane.f32.xlu0 %v523
        %v525 = vpop.xlane.xlu0 %524
        %v526 = vrcp.pop 32.0
        %v527 = vmul.f32 %v525, %v526
        %v528 = vsub.f32 %v519, %v527
        %v529 = vmul.f32 %v528, %v528
        %v530 = vsel %vm522, %v529, 0.0
        %531 = vadd.xlane.f32.xlu0 %v530
        %v532 = vpop.xlane.xlu0 %531
        %v533 = vmul.f32 %v532, %v526
        %v534 = vadd.f32 %v533, 1e-05
        %v535 = vrsqrt.pop %v534
        %v536 = vmul.f32 %v528, %v535
        %v538 = vlaneseq
        %v539 = vshrl.u32 %v538, 7
        %v540 = vsub.s32 0, %v539
        %v541 = vrot.slane %v520, %v540
        %v543 = vmul.f32 %v536, %v541
        %v545 = vlaneseq
        %v546 = vshrl.u32 %v545, 7
        %v547 = vsub.s32 0, %v546
        %v548 = vrot.slane %v521, %v547
        %v550 = vadd.f32 %v543, %v548
        %v551 = vld [vmem:[%s6] sm:$0xff]
        %v552 = vld [vmem:[%s6 + $0x8] sm:$0xff]
        %v553 = vld [vmem:[%s6 + $0x10] sm:$0xff]
        %v554 = vld [vmem:[%s6 + $0x18] sm:$0xff]
        %v555 = vld [vmem:[#allocation2] sm:$0x1]
        %v557 = vlaneseq
        %v558 = vshrl.u32 %v557, 7
        %v559 = vsub.s32 0, %v558
        %v560 = vrot.slane %v555, %v559
        %v563 = vsel %vm522, %v550, 0
        %565 = vmatprep.subr.mxu0 0.0
        %566 = vmatpush1.msra.mxu0 %v551
        %567 = vmatprep.subr.mxu0 0.0
        %568 = vmatpush1.msra.mxu0 %v552
        %569 = vmatprep.subr.mxu0 0.0
        %570 = vmatpush1.msra.mxu0 %v553
        %571 = vmatprep.subr.mxu0 0.0
        %572 = vmatpush1.msra.mxu0 %v554
        %573 = vmatprep.subr.mxu0 0.0
        %574 = vmatpush1.msra.mxu0 0.0
        %575 = vmatprep.subr.mxu0 0.0
        %576 = vmatpush1.msra.mxu0 0.0
        %577 = vmatprep.subr.mxu0 0.0
        %578 = vmatpush1.msra.mxu0 0.0
        %579 = vmatprep.subr.mxu0 0.0
        %580 = vmatpush1.msra.mxu0 0.0
        %581 = vmatprep.subr.mxu0 0.0
        %582 = vmatpush1.msra.mxu0 0.0
        %583 = vmatprep.subr.mxu0 0.0
        %584 = vmatpush1.msra.mxu0 0.0
        %585 = vmatprep.subr.mxu0 0.0
        %586 = vmatpush1.msra.mxu0 0.0
        %587 = vmatprep.subr.mxu0 0.0
        %588 = vmatpush1.msra.mxu0 0.0
        %589 = vmatprep.subr.mxu0 0.0
        %590 = vmatpush1.msra.mxu0 0.0
        %591 = vmatprep.subr.mxu0 0.0
        %592 = vmatpush1.msra.mxu0 0.0
        %593 = vmatprep.subr.mxu0 0.0
        %594 = vmatpush1.msra.mxu0 0.0
        %595 = vmatprep.subr.mxu0 0.0
        %596 = vmatpush1.msra.mxu0 0.0
        %597 = vmatprep.subr.mxu0 0.0
        %598 = vmatpush1.msra.mxu0 0.0
        %599 = vmatprep.subr.mxu0 0.0
        %600 = vmatpush1.msra.mxu0 0.0
        %601 = vmatprep.subr.mxu0 0.0
        %602 = vmatpush1.msra.mxu0 0.0
        %603 = vmatprep.subr.mxu0 0.0
        %604 = vmatpush1.msra.mxu0 0.0
        %605 = vmatprep.subr.mxu0 0.0
        %606 = vmatpush1.msra.mxu0 0.0
        %607 = vmatprep.subr.mxu0 0.0
        %608 = vmatpush1.msra.mxu0 0.0
        %609 = vmatprep.subr.mxu0 0.0
        %610 = vmatpush1.msra.mxu0 0.0
        %611 = vmatprep.subr.mxu0 0.0
        %612 = vmatpush1.msra.mxu0 0.0
        %613 = vmatprep.subr.mxu0 0.0
        %614 = vmatpush1.msra.mxu0 0.0
        %615 = vmatprep.subr.mxu0 0.0
        %616 = vmatpush1.msra.mxu0 0.0
        %617 = vmatprep.subr.mxu0 0.0
        %618 = vmatpush1.msra.mxu0 0.0
        %619 = vmatprep.subr.mxu0 0.0
        %620 = vmatpush1.msra.mxu0 0.0
        %621 = vmatprep.subr.mxu0 0.0
        %622 = vmatpush1.msra.mxu0 0.0
        %623 = vmatprep.subr.mxu0 0.0
        %624 = vmatpush1.msra.mxu0 0.0
        %625 = vmatprep.subr.mxu0 0.0
        %626 = vmatpush1.msra.mxu0 0.0
        %627 = vmatprep.subr.mxu0 0.0
        %628 = vmatpush1.msra.mxu0 0.0
        %629 = vmatprep.mubr.f32.mxu0 0.0
        %630 = vmatmul.mubr.f32.gmra.mrb[0].mxu0 %v563
        %v631 = vpop.f32.mrb[0].mxu0
        %v632 = vadd.f32 %v560, %v631
        %v633 = vpop.f32.mrb[0].mxu0
        %634 = vdwg.mxu0
        %v635 = vld [vmem:[%s8] sm:$0x1]
        %v637 = vlaneseq
        %v638 = vshrl.u32 %v637, 7
        %v639 = vsub.s32 0, %v638
        %v640 = vrot.slane %v635, %v639
        %v642 = vadd.f32 %v632, %v640
        %643 = vst.msk [vmem:[%s360] sm:$0xff] %vm522, %v642
        %s644 = sand.u32 %s246, 1
        %s645 = scalar_lea.sflag [#allocation4], %s644
        %s646 = sand.u32 %s246, 1
        %s647 = smul.addr %s646, 8
        %s648 = scalar_lea.vmem [#allocation3], %s647
        // Predicated region
        $region61: #{tpu_custom_call.1} parent=55 // pred_check
          %p649 = pneg %p256
        $region62: #{tpu_custom_call.1} parent=55 // pred_check_branch
          %651 = sbr.rel (%p649) target = $region64
        $region63: #{tpu_custom_call.1} parent=55 // pred_region
          %s653 = ssub.s32 128, 128
          %654 = vsyncadd %s645, %s653
          %s655 = sadd.s32 %s28, %s27
          %s656 = smul.addr %s655, 128
          %s657 = scalar_lea.hbm %s9, %s656
          %s659 = sshll.u32 %s648, 4
          %s660 = int_to_ptr.vmem [resolvable:$true] %s659
          %662 = dma.vmem_to_hbm [thread:$0]  %s660, 128, %s657, %s645
        $region64: #{tpu_custom_call.1} parent=55 // pred_fallthru
          _
      $region56: #{tpu_custom_call.1} parent=5 // pred_fallthru
        _
      %p663 = scmp.le.s32.totalorder 2, %s18
      // Predicated region
      $region65: #{tpu_custom_call.1} parent=5 // pred_check
        %p664 = pneg %p663
      $region66: #{tpu_custom_call.1} parent=5 // pred_check_branch
        %666 = sbr.rel (%p664) target = $region68
      $region67: #{tpu_custom_call.1} parent=5 // pred_region
        %s667 = ssub.s32 %s18, 2
        // Predicated region
        $region69: #{tpu_custom_call.1} parent=67 // pred_check
          %p668 = pneg %p262
        $region70: #{tpu_custom_call.1} parent=67 // pred_check_branch
          %670 = sbr.rel (%p668) target = $region72
        $region71: #{tpu_custom_call.1} parent=67 // pred_region
          %s671 = sand.u32 %s247, 1
          %s672 = scalar_lea.sflag [#allocation4], %s671
          %s673 = sand.u32 %s247, 1
          %s674 = smul.addr %s673, 8
          %s675 = scalar_lea.vmem [#allocation3], %s674
          %676 = dma.done %s672, 128
        $region72: #{tpu_custom_call.1} parent=67 // pred_fallthru
          _
      $region68: #{tpu_custom_call.1} parent=5 // pred_fallthru
        _
    $region6: #{tpu_custom_call.1} parent=1 // loop_footer
      %s22 = sadd.s32 1, %s18
    $region7: #{tpu_custom_call.1} parent=1 // loop_footer_branch
      %17 = sbr.rel target = $region3
    $region8: #{tpu_custom_call.1} parent=1 // loop_exit
      _
    %677 = vsyncpa [#allocation4], 1
    %s678 = scalar_lea.sflag [#allocation4], 1
    %679 = vsyncpa %s678, 1

</llo_original>
